<compile_context>
chip_gen: v7x
topology: tpu7x:2x2x1
jax: 0.10.0
libtpu: 0.0.40
codegen_flags: <defaults>
</compile_context>

<pallas_src>
import functools

import jax
import jax.numpy as jnp
from jax import lax
from jax.experimental import pallas as pl
from jax.experimental.pallas import tpu as pltpu


def _round_up(x: int, mult: int) -> int:
    return ((x + mult - 1) // mult) * mult


def _pick_tn(n_pad: int, k: int, tm: int, in_bytes: int, out_bytes: int,
             max_tn: int = 2048, budget: int = 12 << 20) -> int:
    """Largest class tile (multiple of 128, dividing n_pad, <= max_tn) whose
    double-buffered VMEM footprint fits a v5e-safe ~12 MiB budget."""
    fixed = 2 * tm * k * in_bytes                       # resident x (counted x2)
    best = 128
    t = 128
    while t <= min(max_tn, n_pad):
        if n_pad % t == 0:
            need = fixed + 2 * t * k * in_bytes + 2 * tm * t * out_bytes
            if need <= budget:
                best = t
        t += 128
    return best


def _mcp_kernel(x_ref, w_ref, lbl_ref, o_ref, *, s, m, eps):
    tn = o_ref.shape[1]
    f32 = jnp.float32

    x = x_ref[...]                                      # (tm, K)  resident
    w = w_ref[...]                                      # (tn, K)  native (N, K) tile

    # ---- fused norms (f32 accumulation), hidden under the weight DMA --------
    xf = x.astype(f32)
    inv_xn = lax.rsqrt(jnp.maximum(
        jnp.sum(xf * xf, axis=-1, keepdims=True), eps * eps))      # (tm, 1)
    wf = w.astype(f32)
    inv_wn = lax.rsqrt(jnp.maximum(
        jnp.sum(wf * wf, axis=-1, keepdims=True), eps * eps))      # (tn, 1)

    # Fold per-class norm into the weight rows (lane-axis broadcast, no
    # transpose), then NT matmul on the MXU contracting K.
    mxu_dt = jnp.promote_types(x.dtype, w.dtype)
    wn = (wf * inv_wn).astype(mxu_dt)                              # (tn, K)
    ip = lax.dot_general(x.astype(mxu_dt), wn,
                         dimension_numbers=(((1,), (1,)), ((), ())),
                         preferred_element_type=f32)               # (tm, tn)

    # s folded into the per-row scale; margin as a single select of s*m.
    cos_s = ip * (inv_xn * s)                                      # = s * cosine

    col0 = pl.program_id(0) * tn
    cols = col0 + lax.broadcasted_iota(jnp.int32, cos_s.shape, 1)
    out = jnp.where(cols == lbl_ref[...], cos_s - (s * m), cos_s)
    o_ref[...] = out.astype(o_ref.dtype)


def margin_cosine_product(inputs, weight, label, *, s=30.0, m=0.4, eps=1e-8,
                          max_tn=2048, out_dtype=jnp.float32):
    """Forward of MarginCosineProduct: s * (cosine_sim(x, W) - one_hot(label)*m)."""
    B, K = inputs.shape
    N, Kw = weight.shape
    assert K == Kw, "in_features mismatch between inputs and weight"

    in_bytes = max(jnp.dtype(inputs.dtype).itemsize, jnp.dtype(weight.dtype).itemsize)
    sublane = {4: 8, 2: 16, 1: 32}.get(jnp.dtype(inputs.dtype).itemsize, 8)
    tm = _round_up(B, sublane)          # batch-sized tile; x stays resident in VMEM
    # TODO(synk): add a batch grid axis if B*K grows beyond a few MiB.

    N_pad = _round_up(N, 128)
    w = weight
    if N_pad != N:
        # Only pad the class axis up to the next 128 (never up to tn).
        # TODO(synk): mask the edge class block in-kernel to avoid this copy.
        w = jnp.pad(weight, ((0, N_pad - N), (0, 0)))

    tn = _pick_tn(N_pad, K, tm, in_bytes, jnp.dtype(out_dtype).itemsize, max_tn)

    # Tiny pads only (<= sublane-1 batch rows).  Padded rows have zero x
    # (-> zero output) and label -1 (never matches a valid class column).
    x_p = jnp.pad(inputs, ((0, tm - B), (0, 0)))
    lbl_p = jnp.pad(label.astype(jnp.int32).reshape(B, 1), ((0, tm - B), (0, 0)),
                    constant_values=-1)

    kernel = functools.partial(_mcp_kernel, s=float(s), m=float(m), eps=float(eps))

    out = pl.pallas_call(
        kernel,
        out_shape=jax.ShapeDtypeStruct((tm, N_pad), out_dtype),
        grid_spec=pltpu.PrefetchScalarGridSpec(
            num_scalar_prefetch=0,
            grid=(N_pad // tn,),                         # 1-D loop over class blocks
            in_specs=[
                pl.BlockSpec((tm, K), lambda j: (0, 0)),  # x: resident, DMA'd once
                pl.BlockSpec((tn, K), lambda j: (j, 0)),  # weight: native layout stream
                pl.BlockSpec((tm, 1), lambda j: (0, 0)),  # labels: resident
            ],
            out_specs=pl.BlockSpec((tm, tn), lambda j: (0, j)),
        ),
        compiler_params=pltpu.CompilerParams(
            dimension_semantics=("parallel",)),          # megacore-shardable class axis
    )(x_p, w, lbl_p)

    return out[:B, :N]


def _reference(inputs, weight, label, s=30.0, m=0.4, eps=1e-8):
    ip = inputs @ weight.T
    w1 = jnp.linalg.norm(inputs, axis=1)
    w2 = jnp.linalg.norm(weight, axis=1)
    cosine = ip / jnp.maximum(jnp.outer(w1, w2), eps)
    one_hot = jax.nn.one_hot(label, weight.shape[0], dtype=jnp.float32)
    return s * (cosine - one_hot * m)


if __name__ == "__main__":
    B = 8               # batch
    in_features = 64
    out_features = 256  # num classes
    s, m = 30.0, 0.4

    key = jax.random.PRNGKey(0)
    kx, kw, kl = jax.random.split(key, 3)

    inputs = jax.random.normal(kx, (B, in_features), dtype=jnp.float32)

    # xavier_uniform_ init for weight (out_features, in_features)
    bound = (6.0 / (in_features + out_features)) ** 0.5
    weight = jax.random.uniform(kw, (out_features, in_features),
                                dtype=jnp.float32, minval=-bound, maxval=bound)

    label = jax.random.randint(kl, (B,), 0, out_features, dtype=jnp.int32)

    ref = _reference(inputs, weight, label, s=s, m=m)

    # f32 path: matches the PyTorch reference.
    out = margin_cosine_product(inputs, weight, label, s=s, m=m)
    out = jax.block_until_ready(out)
    assert out.shape == (B, out_features)
    assert jnp.allclose(out, ref, atol=1e-4, rtol=1e-4), "f32 mismatch vs reference"

    # bf16-stored-params path (no wrapper cast pass in real use; half the HBM
    # weight stream, 2x MXU rate).  Looser tolerance.
    out_bf16 = margin_cosine_product(inputs.astype(jnp.bfloat16),
                                     weight.astype(jnp.bfloat16), label, s=s, m=m)
    out_bf16 = jax.block_until_ready(out_bf16)
    assert out_bf16.shape == (B, out_features)
    assert jnp.allclose(out_bf16, ref, atol=0.5, rtol=5e-2), "bf16 mismatch vs reference"

    print("KERNEL_OK")
</pallas_src>

<mosaic_0001>
module attributes {stable_mosaic.version = 11 : i64} {
  func.func @_mcp_kernel(%arg0: i32, %arg1: memref<8x64xf32, #tpu.memory_space<vmem>>, %arg2: memref<256x64xf32, #tpu.memory_space<vmem>>, %arg3: memref<8x1xi32, #tpu.memory_space<vmem>>, %arg4: memref<8x256xf32, #tpu.memory_space<vmem>>) attributes {dimension_semantics = [#tpu.dimension_semantics<parallel>], iteration_bounds = array<i64: 1>, scalar_prefetch = 0 : i64, scratch_operands = 0 : i64, tpu.core_type = #tpu.core_type<tc>, window_params = [{pipeline_mode = #tpu.pipeline_mode<synchronous>, transform_indices = @transform_0, window_bounds = array<i64: 8, 64>}, {transform_indices = @transform_1, window_bounds = array<i64: 256, 64>}, {pipeline_mode = #tpu.pipeline_mode<synchronous>, transform_indices = @transform_2, window_bounds = array<i64: 8, 1>}, {transform_indices = @transform_3, window_bounds = array<i64: 8, 256>}]} {
    %c0 = arith.constant 0 : index
    %c0_0 = arith.constant 0 : index
    %0 = vector.load %arg1[%c0, %c0_0] : memref<8x64xf32, #tpu.memory_space<vmem>>, vector<8x64xf32>
    %c0_1 = arith.constant 0 : index
    %c0_2 = arith.constant 0 : index
    %1 = vector.load %arg2[%c0_1, %c0_2] : memref<256x64xf32, #tpu.memory_space<vmem>>, vector<256x64xf32>
    %2 = arith.mulf %0, %0 : vector<8x64xf32>
    %cst = arith.constant dense<0.000000e+00> : vector<8xf32>
    %3 = vector.multi_reduction <add>, %2, %cst [1] : vector<8x64xf32> to vector<8xf32>
    %4 = vector.shape_cast %3 : vector<8xf32> to vector<8x1xf32>
    %cst_3 = arith.constant 1.000000e-16 : f32
    %5 = vector.broadcast %cst_3 : f32 to vector<8x1xf32>
    %6 = arith.maximumf %4, %5 : vector<8x1xf32>
    %7 = math.rsqrt %6 : vector<8x1xf32>
    %8 = arith.mulf %1, %1 : vector<256x64xf32>
    %cst_4 = arith.constant dense<0.000000e+00> : vector<256xf32>
    %9 = vector.multi_reduction <add>, %8, %cst_4 [1] : vector<256x64xf32> to vector<256xf32>
    %10 = vector.shape_cast %9 : vector<256xf32> to vector<256x1xf32>
    %cst_5 = arith.constant 1.000000e-16 : f32
    %11 = vector.broadcast %cst_5 : f32 to vector<256x1xf32>
    %12 = arith.maximumf %10, %11 : vector<256x1xf32>
    %13 = math.rsqrt %12 : vector<256x1xf32>
    %14 = vector.broadcast %13 : vector<256x1xf32> to vector<256x64xf32>
    %15 = arith.mulf %1, %14 : vector<256x64xf32>
    %cst_6 = arith.constant dense<0.000000e+00> : vector<8x256xf32>
    %16 = tpu.matmul %0, %15, %cst_6 {dimension_numbers = #tpu.dot_dimension_numbers<[1], [1], [0], [0], [0, 0, 1, 0], [], []>} : vector<8x64xf32>, vector<256x64xf32>, vector<8x256xf32> -> vector<8x256xf32>
    %cst_7 = arith.constant 3.000000e+01 : f32
    %17 = vector.broadcast %cst_7 : f32 to vector<8x1xf32>
    %18 = arith.mulf %7, %17 : vector<8x1xf32>
    %19 = vector.broadcast %18 : vector<8x1xf32> to vector<8x256xf32>
    %20 = arith.mulf %16, %19 : vector<8x256xf32>
    %c256_i32 = arith.constant 256 : i32
    %21 = arith.muli %arg0, %c256_i32 : i32
    %22 = tpu.iota {dimensions = array<i32: 1>} : vector<8x256xi32>
    %23 = vector.broadcast %21 : i32 to vector<8x256xi32>
    %24 = arith.addi %23, %22 : vector<8x256xi32>
    %c0_8 = arith.constant 0 : index
    %c0_9 = arith.constant 0 : index
    %25 = vector.load %arg3[%c0_8, %c0_9] : memref<8x1xi32, #tpu.memory_space<vmem>>, vector<8x1xi32>
    %26 = vector.broadcast %25 : vector<8x1xi32> to vector<8x256xi32>
    %27 = arith.cmpi eq, %24, %26 : vector<8x256xi32>
    %cst_10 = arith.constant 1.200000e+01 : f32
    %28 = vector.broadcast %cst_10 : f32 to vector<8x256xf32>
    %29 = arith.subf %20, %28 : vector<8x256xf32>
    %30 = arith.select %27, %29, %20 : vector<8x256xi1>, vector<8x256xf32>
    %c0_11 = arith.constant 0 : index
    %c0_12 = arith.constant 0 : index
    %31 = vector.load %arg4[%c0_11, %c0_12] : memref<8x256xf32, #tpu.memory_space<vmem>>, vector<8x256xf32>
    tpu.vector_store %arg4[%c0_11, %c0_12], %30 {strides = array<i32>} : memref<8x256xf32, #tpu.memory_space<vmem>>, vector<8x256xf32>,
    return
  }
  func.func @transform_0(%arg0: i32) -> (i32, i32) {
    %c0_i32 = arith.constant 0 : i32
    %c0_i32_0 = arith.constant 0 : i32
    %c0_i32_1 = arith.constant 0 : i32
    return %c0_i32, %c0_i32_0 : i32, i32
  }
  func.func @transform_1(%arg0: i32) -> (i32, i32) {
    %c0_i32 = arith.constant 0 : i32
    %c0_i32_0 = arith.constant 0 : i32
    return %arg0, %c0_i32 : i32, i32
  }
  func.func @transform_2(%arg0: i32) -> (i32, i32) {
    %c0_i32 = arith.constant 0 : i32
    %c0_i32_0 = arith.constant 0 : i32
    %c0_i32_1 = arith.constant 0 : i32
    return %c0_i32, %c0_i32_0 : i32, i32
  }
  func.func @transform_3(%arg0: i32) -> (i32, i32) {
    %c0_i32 = arith.constant 0 : i32
    %c0_i32_0 = arith.constant 0 : i32
    return %c0_i32, %arg0 : i32, i32
  }
}

</mosaic_0001>

<llo_original>
// kernel: tpu_custom_call.1
$region0: #{tpu_custom_call.1}
  #allocation0 [shape = 'u32[]', space=smem, size = 0x4, offset = 0x4, fixed_abs, tag = 'smem constant byte address 0x4 - core index']
  #allocation1 [shape = 'u32[144,128]{1,0:T(1,128)}', space=vmem, size = 0x12000, scoped, tag = 'internal scratch']
  %s0 = inlined_call_operand.vmem [shape: f32[8,64], index: 0, kind: input, shape index: {}]
  %s1 = inlined_call_operand.vmem [shape: f32[256,64], index: 1, kind: input, shape index: {}]
  %s2 = inlined_call_operand.vmem [shape: s32[8,1], index: 2, kind: input, shape index: {}]
  %s3 = inlined_call_operand.hbm [shape: f32[8,256], index: 3, kind: output, shape index: {}]
  %s4 = sld [smem:[#allocation0]]
  $region22: #{tpu_custom_call.1} parent=0
    _
  %s6 = ssub.s32 1, %s4
  %s7 = scalar_select 0, %s6, %s4
  $region1: #{tpu_custom_call.1} parent=0
    #allocation2 [shape = 'u8[8192]{0}', space=vmem, size = 0x2000, scoped, tag = 'output window, operand 0, single buffered']
    #allocation3 [shape = 's32[1]{0}', space=sflag, size = 0x4, scoped, tag = 'scoped memory for tpu_custom_call.1']
    %8 = vsyncpa [#allocation3], 0
    // Predicated region
    $region2: #{tpu_custom_call.1} parent=1 // pred_check
      _
    $region3: #{tpu_custom_call.1} parent=1 // pred_check_branch
      %10 = sbr.rel (0) target = $region5
    $region4: #{tpu_custom_call.1} parent=1 // pred_region
      _
    $region5: #{tpu_custom_call.1} parent=1 // pred_fallthru
      _
    // Predicated region
    $region6: #{tpu_custom_call.1} parent=1 // pred_check
      _
    $region7: #{tpu_custom_call.1} parent=1 // pred_check_branch
      %12 = sbr.rel (0) target = $region9
    $region8: #{tpu_custom_call.1} parent=1 // pred_region
      _
    $region9: #{tpu_custom_call.1} parent=1 // pred_fallthru
      _
    // Predicated region
    $region10: #{tpu_custom_call.1} parent=1 // pred_check
      _
    $region11: #{tpu_custom_call.1} parent=1 // pred_check_branch
      %14 = sbr.rel (0) target = $region13
    $region12: #{tpu_custom_call.1} parent=1 // pred_region
      _
    $region13: #{tpu_custom_call.1} parent=1 // pred_fallthru
      _
    %v15 = vld [vmem:[%s0] sm:$0xff]
    %v16 = vld [vmem:[%s1] sm:$0xff]
    %v17 = vld [vmem:[%s1 + $0x8] sm:$0xff]
    %v18 = vld [vmem:[%s1 + $0x10] sm:$0xff]
    %v19 = vld [vmem:[%s1 + $0x18] sm:$0xff]
    %v20 = vld [vmem:[%s1 + $0x20] sm:$0xff]
    %v21 = vld [vmem:[%s1 + $0x28] sm:$0xff]
    %v22 = vld [vmem:[%s1 + $0x30] sm:$0xff]
    %v23 = vld [vmem:[%s1 + $0x38] sm:$0xff]
    %v24 = vld [vmem:[%s1 + $0x40] sm:$0xff]
    %v25 = vld [vmem:[%s1 + $0x48] sm:$0xff]
    %v26 = vld [vmem:[%s1 + $0x50] sm:$0xff]
    %v27 = vld [vmem:[%s1 + $0x58] sm:$0xff]
    %v28 = vld [vmem:[%s1 + $0x60] sm:$0xff]
    %v29 = vld [vmem:[%s1 + $0x68] sm:$0xff]
    %v30 = vld [vmem:[%s1 + $0x70] sm:$0xff]
    %v31 = vld [vmem:[%s1 + $0x78] sm:$0xff]
    %v32 = vld [vmem:[%s1 + $0x80] sm:$0xff]
    %v33 = vld [vmem:[%s1 + $0x88] sm:$0xff]
    %v34 = vld [vmem:[%s1 + $0x90] sm:$0xff]
    %v35 = vld [vmem:[%s1 + $0x98] sm:$0xff]
    %v36 = vld [vmem:[%s1 + $0xa0] sm:$0xff]
    %v37 = vld [vmem:[%s1 + $0xa8] sm:$0xff]
    %v38 = vld [vmem:[%s1 + $0xb0] sm:$0xff]
    %v39 = vld [vmem:[%s1 + $0xb8] sm:$0xff]
    %v40 = vld [vmem:[%s1 + $0xc0] sm:$0xff]
    %v41 = vld [vmem:[%s1 + $0xc8] sm:$0xff]
    %v42 = vld [vmem:[%s1 + $0xd0] sm:$0xff]
    %v43 = vld [vmem:[%s1 + $0xd8] sm:$0xff]
    %v44 = vld [vmem:[%s1 + $0xe0] sm:$0xff]
    %v45 = vld [vmem:[%s1 + $0xe8] sm:$0xff]
    %v46 = vld [vmem:[%s1 + $0xf0] sm:$0xff]
    %v47 = vld [vmem:[%s1 + $0xf8] sm:$0xff]
    %v48 = vmul.f32 %v15, %v15
    %vm49 = vcmask 523264
    %v50 = vsel %vm49, %v48, 0.0
    %51 = vadd.xlane.f32.xlu0 %v50
    %v52 = vpop.xlane.xlu0 %51
    %v53 = vmax.f32 %v52, 1e-16
    %v54 = vrsqrt.pop %v53
    %v55 = vmul.f32 %v16, %v16
    %v56 = vmul.f32 %v17, %v17
    %v57 = vmul.f32 %v18, %v18
    %v58 = vmul.f32 %v19, %v19
    %v59 = vmul.f32 %v20, %v20
    %v60 = vmul.f32 %v21, %v21
    %v61 = vmul.f32 %v22, %v22
    %v62 = vmul.f32 %v23, %v23
    %v63 = vmul.f32 %v24, %v24
    %v64 = vmul.f32 %v25, %v25
    %v65 = vmul.f32 %v26, %v26
    %v66 = vmul.f32 %v27, %v27
    %v67 = vmul.f32 %v28, %v28
    %v68 = vmul.f32 %v29, %v29
    %v69 = vmul.f32 %v30, %v30
    %v70 = vmul.f32 %v31, %v31
    %v71 = vmul.f32 %v32, %v32
    %v72 = vmul.f32 %v33, %v33
    %v73 = vmul.f32 %v34, %v34
    %v74 = vmul.f32 %v35, %v35
    %v75 = vmul.f32 %v36, %v36
    %v76 = vmul.f32 %v37, %v37
    %v77 = vmul.f32 %v38, %v38
    %v78 = vmul.f32 %v39, %v39
    %v79 = vmul.f32 %v40, %v40
    %v80 = vmul.f32 %v41, %v41
    %v81 = vmul.f32 %v42, %v42
    %v82 = vmul.f32 %v43, %v43
    %v83 = vmul.f32 %v44, %v44
    %v84 = vmul.f32 %v45, %v45
    %v85 = vmul.f32 %v46, %v46
    %v86 = vmul.f32 %v47, %v47
    %v87 = vsel %vm49, %v55, 0.0
    %88 = vadd.xlane.f32.xlu0 %v87
    %v89 = vpop.xlane.xlu0 %88
    %v90 = vsel %vm49, %v56, 0.0
    %91 = vadd.xlane.f32.xlu0 %v90
    %v92 = vpop.xlane.xlu0 %91
    %v93 = vsel %vm49, %v57, 0.0
    %94 = vadd.xlane.f32.xlu0 %v93
    %v95 = vpop.xlane.xlu0 %94
    %v96 = vsel %vm49, %v58, 0.0
    %97 = vadd.xlane.f32.xlu0 %v96
    %v98 = vpop.xlane.xlu0 %97
    %v99 = vsel %vm49, %v59, 0.0
    %100 = vadd.xlane.f32.xlu0 %v99
    %v101 = vpop.xlane.xlu0 %100
    %v102 = vsel %vm49, %v60, 0.0
    %103 = vadd.xlane.f32.xlu0 %v102
    %v104 = vpop.xlane.xlu0 %103
    %v105 = vsel %vm49, %v61, 0.0
    %106 = vadd.xlane.f32.xlu0 %v105
    %v107 = vpop.xlane.xlu0 %106
    %v108 = vsel %vm49, %v62, 0.0
    %109 = vadd.xlane.f32.xlu0 %v108
    %v110 = vpop.xlane.xlu0 %109
    %v111 = vsel %vm49, %v63, 0.0
    %112 = vadd.xlane.f32.xlu0 %v111
    %v113 = vpop.xlane.xlu0 %112
    %v114 = vsel %vm49, %v64, 0.0
    %115 = vadd.xlane.f32.xlu0 %v114
    %v116 = vpop.xlane.xlu0 %115
    %v117 = vsel %vm49, %v65, 0.0
    %118 = vadd.xlane.f32.xlu0 %v117
    %v119 = vpop.xlane.xlu0 %118
    %v120 = vsel %vm49, %v66, 0.0
    %121 = vadd.xlane.f32.xlu0 %v120
    %v122 = vpop.xlane.xlu0 %121
    %v123 = vsel %vm49, %v67, 0.0
    %124 = vadd.xlane.f32.xlu0 %v123
    %v125 = vpop.xlane.xlu0 %124
    %v126 = vsel %vm49, %v68, 0.0
    %127 = vadd.xlane.f32.xlu0 %v126
    %v128 = vpop.xlane.xlu0 %127
    %v129 = vsel %vm49, %v69, 0.0
    %130 = vadd.xlane.f32.xlu0 %v129
    %v131 = vpop.xlane.xlu0 %130
    %v132 = vsel %vm49, %v70, 0.0
    %133 = vadd.xlane.f32.xlu0 %v132
    %v134 = vpop.xlane.xlu0 %133
    %v135 = vsel %vm49, %v71, 0.0
    %136 = vadd.xlane.f32.xlu0 %v135
    %v137 = vpop.xlane.xlu0 %136
    %v138 = vsel %vm49, %v72, 0.0
    %139 = vadd.xlane.f32.xlu0 %v138
    %v140 = vpop.xlane.xlu0 %139
    %v141 = vsel %vm49, %v73, 0.0
    %142 = vadd.xlane.f32.xlu0 %v141
    %v143 = vpop.xlane.xlu0 %142
    %v144 = vsel %vm49, %v74, 0.0
    %145 = vadd.xlane.f32.xlu0 %v144
    %v146 = vpop.xlane.xlu0 %145
    %v147 = vsel %vm49, %v75, 0.0
    %148 = vadd.xlane.f32.xlu0 %v147
    %v149 = vpop.xlane.xlu0 %148
    %v150 = vsel %vm49, %v76, 0.0
    %151 = vadd.xlane.f32.xlu0 %v150
    %v152 = vpop.xlane.xlu0 %151
    %v153 = vsel %vm49, %v77, 0.0
    %154 = vadd.xlane.f32.xlu0 %v153
    %v155 = vpop.xlane.xlu0 %154
    %v156 = vsel %vm49, %v78, 0.0
    %157 = vadd.xlane.f32.xlu0 %v156
    %v158 = vpop.xlane.xlu0 %157
    %v159 = vsel %vm49, %v79, 0.0
    %160 = vadd.xlane.f32.xlu0 %v159
    %v161 = vpop.xlane.xlu0 %160
    %v162 = vsel %vm49, %v80, 0.0
    %163 = vadd.xlane.f32.xlu0 %v162
    %v164 = vpop.xlane.xlu0 %163
    %v165 = vsel %vm49, %v81, 0.0
    %166 = vadd.xlane.f32.xlu0 %v165
    %v167 = vpop.xlane.xlu0 %166
    %v168 = vsel %vm49, %v82, 0.0
    %169 = vadd.xlane.f32.xlu0 %v168
    %v170 = vpop.xlane.xlu0 %169
    %v171 = vsel %vm49, %v83, 0.0
    %172 = vadd.xlane.f32.xlu0 %v171
    %v173 = vpop.xlane.xlu0 %172
    %v174 = vsel %vm49, %v84, 0.0
    %175 = vadd.xlane.f32.xlu0 %v174
    %v176 = vpop.xlane.xlu0 %175
    %v177 = vsel %vm49, %v85, 0.0
    %178 = vadd.xlane.f32.xlu0 %v177
    %v179 = vpop.xlane.xlu0 %178
    %v180 = vsel %vm49, %v86, 0.0
    %181 = vadd.xlane.f32.xlu0 %v180
    %v182 = vpop.xlane.xlu0 %181
    %v183 = vmax.f32 %v89, 1e-16
    %v184 = vmax.f32 %v92, 1e-16
    %v185 = vmax.f32 %v95, 1e-16
    %v186 = vmax.f32 %v98, 1e-16
    %v187 = vmax.f32 %v101, 1e-16
    %v188 = vmax.f32 %v104, 1e-16
    %v189 = vmax.f32 %v107, 1e-16
    %v190 = vmax.f32 %v110, 1e-16
    %v191 = vmax.f32 %v113, 1e-16
    %v192 = vmax.f32 %v116, 1e-16
    %v193 = vmax.f32 %v119, 1e-16
    %v194 = vmax.f32 %v122, 1e-16
    %v195 = vmax.f32 %v125, 1e-16
    %v196 = vmax.f32 %v128, 1e-16
    %v197 = vmax.f32 %v131, 1e-16
    %v198 = vmax.f32 %v134, 1e-16
    %v199 = vmax.f32 %v137, 1e-16
    %v200 = vmax.f32 %v140, 1e-16
    %v201 = vmax.f32 %v143, 1e-16
    %v202 = vmax.f32 %v146, 1e-16
    %v203 = vmax.f32 %v149, 1e-16
    %v204 = vmax.f32 %v152, 1e-16
    %v205 = vmax.f32 %v155, 1e-16
    %v206 = vmax.f32 %v158, 1e-16
    %v207 = vmax.f32 %v161, 1e-16
    %v208 = vmax.f32 %v164, 1e-16
    %v209 = vmax.f32 %v167, 1e-16
    %v210 = vmax.f32 %v170, 1e-16
    %v211 = vmax.f32 %v173, 1e-16
    %v212 = vmax.f32 %v176, 1e-16
    %v213 = vmax.f32 %v179, 1e-16
    %v214 = vmax.f32 %v182, 1e-16
    %v215 = vrsqrt.pop %v183
    %v216 = vrsqrt.pop %v184
    %v217 = vrsqrt.pop %v185
    %v218 = vrsqrt.pop %v186
    %v219 = vrsqrt.pop %v187
    %v220 = vrsqrt.pop %v188
    %v221 = vrsqrt.pop %v189
    %v222 = vrsqrt.pop %v190
    %v223 = vrsqrt.pop %v191
    %v224 = vrsqrt.pop %v192
    %v225 = vrsqrt.pop %v193
    %v226 = vrsqrt.pop %v194
    %v227 = vrsqrt.pop %v195
    %v228 = vrsqrt.pop %v196
    %v229 = vrsqrt.pop %v197
    %v230 = vrsqrt.pop %v198
    %v231 = vrsqrt.pop %v199
    %v232 = vrsqrt.pop %v200
    %v233 = vrsqrt.pop %v201
    %v234 = vrsqrt.pop %v202
    %v235 = vrsqrt.pop %v203
    %v236 = vrsqrt.pop %v204
    %v237 = vrsqrt.pop %v205
    %v238 = vrsqrt.pop %v206
    %v239 = vrsqrt.pop %v207
    %v240 = vrsqrt.pop %v208
    %v241 = vrsqrt.pop %v209
    %v242 = vrsqrt.pop %v210
    %v243 = vrsqrt.pop %v211
    %v244 = vrsqrt.pop %v212
    %v245 = vrsqrt.pop %v213
    %v246 = vrsqrt.pop %v214
    %v247 = vmul.f32 %v16, %v215
    %v248 = vmul.f32 %v17, %v216
    %v249 = vmul.f32 %v18, %v217
    %v250 = vmul.f32 %v19, %v218
    %v251 = vmul.f32 %v20, %v219
    %v252 = vmul.f32 %v21, %v220
    %v253 = vmul.f32 %v22, %v221
    %v254 = vmul.f32 %v23, %v222
    %v255 = vmul.f32 %v24, %v223
    %v256 = vmul.f32 %v25, %v224
    %v257 = vmul.f32 %v26, %v225
    %v258 = vmul.f32 %v27, %v226
    %v259 = vmul.f32 %v28, %v227
    %v260 = vmul.f32 %v29, %v228
    %v261 = vmul.f32 %v30, %v229
    %v262 = vmul.f32 %v31, %v230
    %v263 = vmul.f32 %v32, %v231
    %v264 = vmul.f32 %v33, %v232
    %v265 = vmul.f32 %v34, %v233
    %v266 = vmul.f32 %v35, %v234
    %v267 = vmul.f32 %v36, %v235
    %v268 = vmul.f32 %v37, %v236
    %v269 = vmul.f32 %v38, %v237
    %v270 = vmul.f32 %v39, %v238
    %v271 = vmul.f32 %v40, %v239
    %v272 = vmul.f32 %v41, %v240
    %v273 = vmul.f32 %v42, %v241
    %v274 = vmul.f32 %v43, %v242
    %v275 = vmul.f32 %v44, %v243
    %v276 = vmul.f32 %v45, %v244
    %v277 = vmul.f32 %v46, %v245
    %v278 = vmul.f32 %v47, %v246
    %v280 = vsel %vm49, %v15, 0
    %v283 = vsel %vm49, %v247, 0
    %v286 = vsel %vm49, %v248, 0
    %v289 = vsel %vm49, %v249, 0
    %v292 = vsel %vm49, %v250, 0
    %v295 = vsel %vm49, %v251, 0
    %v298 = vsel %vm49, %v252, 0
    %v301 = vsel %vm49, %v253, 0
    %v304 = vsel %vm49, %v254, 0
    %v307 = vsel %vm49, %v255, 0
    %v310 = vsel %vm49, %v256, 0
    %v313 = vsel %vm49, %v257, 0
    %v316 = vsel %vm49, %v258, 0
    %v319 = vsel %vm49, %v259, 0
    %v322 = vsel %vm49, %v260, 0
    %v325 = vsel %vm49, %v261, 0
    %v328 = vsel %vm49, %v262, 0
    %v331 = vsel %vm49, %v263, 0
    %v334 = vsel %vm49, %v264, 0
    %v337 = vsel %vm49, %v265, 0
    %v340 = vsel %vm49, %v266, 0
    %v343 = vsel %vm49, %v267, 0
    %v346 = vsel %vm49, %v268, 0
    %v349 = vsel %vm49, %v269, 0
    %v352 = vsel %vm49, %v270, 0
    %v355 = vsel %vm49, %v271, 0
    %v358 = vsel %vm49, %v272, 0
    %v361 = vsel %vm49, %v273, 0
    %v364 = vsel %vm49, %v274, 0
    %v367 = vsel %vm49, %v275, 0
    %v370 = vsel %vm49, %v276, 0
    %v373 = vsel %vm49, %v277, 0
    %v376 = vsel %vm49, %v278, 0
    %378 = vmatprep.subr.mxu0 0.0
    %379 = vmatpush1.xpose.msra.mxu0 %v283
    %380 = vmatprep.subr.mxu0 0.0
    %381 = vmatpush1.xpose.msra.mxu0 %v286
    %382 = vmatprep.subr.mxu0 0.0
    %383 = vmatpush1.xpose.msra.mxu0 %v289
    %384 = vmatprep.subr.mxu0 0.0
    %385 = vmatpush1.xpose.msra.mxu0 %v292
    %386 = vmatprep.subr.mxu0 0.0
    %387 = vmatpush1.xpose.msra.mxu0 %v295
    %388 = vmatprep.subr.mxu0 0.0
    %389 = vmatpush1.xpose.msra.mxu0 %v298
    %390 = vmatprep.subr.mxu0 0.0
    %391 = vmatpush1.xpose.msra.mxu0 %v301
    %392 = vmatprep.subr.mxu0 0.0
    %393 = vmatpush1.xpose.msra.mxu0 %v304
    %394 = vmatprep.subr.mxu0 0.0
    %395 = vmatpush1.xpose.msra.mxu0 %v307
    %396 = vmatprep.subr.mxu0 0.0
    %397 = vmatpush1.xpose.msra.mxu0 %v310
    %398 = vmatprep.subr.mxu0 0.0
    %399 = vmatpush1.xpose.msra.mxu0 %v313
    %400 = vmatprep.subr.mxu0 0.0
    %401 = vmatpush1.xpose.msra.mxu0 %v316
    %402 = vmatprep.subr.mxu0 0.0
    %403 = vmatpush1.xpose.msra.mxu0 %v319
    %404 = vmatprep.subr.mxu0 0.0
    %405 = vmatpush1.xpose.msra.mxu0 %v322
    %406 = vmatprep.subr.mxu0 0.0
    %407 = vmatpush1.xpose.msra.mxu0 %v325
    %408 = vmatprep.subr.mxu0 0.0
    %409 = vmatpush1.xpose.msra.mxu0 %v328
    %410 = vmatprep.subr.mxu0 0.0
    %411 = vmatpush1.xpose.msra.mxu0 %v331
    %412 = vmatprep.subr.mxu0 0.0
    %413 = vmatpush1.xpose.msra.mxu0 %v334
    %414 = vmatprep.subr.mxu0 0.0
    %415 = vmatpush1.xpose.msra.mxu0 %v337
    %416 = vmatprep.subr.mxu0 0.0
    %417 = vmatpush1.xpose.msra.mxu0 %v340
    %418 = vmatprep.subr.mxu0 0.0
    %419 = vmatpush1.xpose.msra.mxu0 %v343
    %420 = vmatprep.subr.mxu0 0.0
    %421 = vmatpush1.xpose.msra.mxu0 %v346
    %422 = vmatprep.subr.mxu0 0.0
    %423 = vmatpush1.xpose.msra.mxu0 %v349
    %424 = vmatprep.subr.mxu0 0.0
    %425 = vmatpush1.xpose.msra.mxu0 %v352
    %426 = vmatprep.subr.mxu0 0.0
    %427 = vmatpush1.xpose.msra.mxu0 %v355
    %428 = vmatprep.subr.mxu0 0.0
    %429 = vmatpush1.xpose.msra.mxu0 %v358
    %430 = vmatprep.subr.mxu0 0.0
    %431 = vmatpush1.xpose.msra.mxu0 %v361
    %432 = vmatprep.subr.mxu0 0.0
    %433 = vmatpush1.xpose.msra.mxu0 %v364
    %434 = vmatprep.subr.mxu0 0.0
    %435 = vmatpush1.xpose.msra.mxu0 %v367
    %436 = vmatprep.subr.mxu0 0.0
    %437 = vmatpush1.xpose.msra.mxu0 %v370
    %438 = vmatprep.subr.mxu0 0.0
    %439 = vmatpush1.xpose.msra.mxu0 %v373
    %440 = vmatprep.subr.mxu0 0.0
    %441 = vmatpush1.xpose.msra.mxu0 %v376
    %442 = vmatprep.mubr.f32.mxu0 0.0
    %443 = vmatmul.mubr.f32.gmra.mrb[0].mxu0 %v280
    %v444 = vpop.f32.mrb[0].mxu0
    %v445 = vadd.f32 0.0, %v444
    %v446 = vpop.f32.mrb[0].mxu0
    %v447 = vadd.f32 0.0, %v446
    %448 = vdwg.mxu0
    %v449 = vmul.f32 %v54, 30.0
    %v450 = vmul.f32 %v445, %v449
    %v451 = vmul.f32 %v447, %v449
    %s452 = smul.u32 0, 256
    %v453 = vlaneseq
    %v454 = vand.u32 %v453, 127
    %v455 = vadd.s32 %v454, 128
    %v456 = vstv %s452
    %v457 = vadd.s32 %v456, %v454
    %v458 = vadd.s32 %v456, %v455
    %v459 = vld [vmem:[%s2] sm:$0xff]
    %460 = vset.pattern.permute.xlu0 0
    %461 = vperm.xlu0 %460, %v459
    %v462 = vpop.permute.xlu0 %461
    %vm463 = vcmp.eq.s32.totalorder %v457, %v462
    %vm464 = vcmp.eq.s32.totalorder %v458, %v462
    %v465 = vsub.f32 %v450, 12.0
    %v466 = vsub.f32 %v451, 12.0
    %v467 = vsel %vm463, %v465, %v450
    %v468 = vsel %vm464, %v466, %v451
    %469 = vst [vmem:[#allocation2] sm:$0xff] %v467
    %470 = vst [vmem:[#allocation2 + $0x8] sm:$0xff] %v468
    // Predicated region
    $region14: #{tpu_custom_call.1} parent=1 // pred_check
      _
    $region15: #{tpu_custom_call.1} parent=1 // pred_check_branch
      %472 = sbr.rel (0) target = $region17
    $region16: #{tpu_custom_call.1} parent=1 // pred_region
      %s474 = ssub.s32 256, 256
      %475 = vsyncadd [#allocation3], %s474
      %s477 = sshll.u32 [#allocation2], 4
      %s478 = int_to_ptr.vmem [resolvable:$true] %s477
      %480 = dma.vmem_to_hbm [thread:$0]  %s478, 256, %s3, [#allocation3]
    $region17: #{tpu_custom_call.1} parent=1 // pred_fallthru
      _
    // Predicated region
    $region18: #{tpu_custom_call.1} parent=1 // pred_check
      _
    $region19: #{tpu_custom_call.1} parent=1 // pred_check_branch
      %482 = sbr.rel (0) target = $region21
    $region20: #{tpu_custom_call.1} parent=1 // pred_region
      %483 = dma.done [#allocation3], 256
    $region21: #{tpu_custom_call.1} parent=1 // pred_fallthru
      _
    %484 = vsyncpa [#allocation3], 1

</llo_original>
